<compile_context>
chip_gen: v5e
topology: v5e:2x2
jax: 0.10.0
libtpu: 0.0.40
codegen_flags: <defaults>
</compile_context>

<pallas_src>
import functools

import jax
import jax.numpy as jnp
from jax.experimental import pallas as pl
from jax.experimental.pallas import tpu as pltpu


# ----------------------------------------------------------------------------
# Config (synthetic, deterministic).  widths = [in_size, 64, 32, 32, 16, out]
# ----------------------------------------------------------------------------
IN_SIZE = 4 * 16 * 16     # from flattening (B, 4, 16, 16)
OUT_SIZE = 10
WIDTHS = [IN_SIZE, 64, 32, 32, 16, OUT_SIZE]
H0, H1, H2 = 4, 4, 3      # heights of the vector-valued layers (L0/L1, L2)

# TODO(synk): the 'MED' aggregate (median over height) has no clean vector
# reduction on TPU for general height; it is not part of this cfg.


# ----------------------------------------------------------------------------
# Fused kernel: all five layers, everything resident in VMEM.
# ----------------------------------------------------------------------------
def vectornet_kernel(x_ref,
                     w0_ref, b0_ref,      # (1024, 256) bf16, (1, 256) f32
                     w1_ref, b1_ref,      # (256, 128)  f32,  (1, 128) f32
                     w2_ref, b2_ref,      # (96, 96)    f32,  (1, 96)  f32
                     w3_ref, b3_ref,      # (32, 16)    f32,  (1, 16)  f32
                     w4_ref, b4_ref,      # (16, 10)    f32,  (1, 10)  f32
                     o_ref):              # (B, 10)     f32
    # --- L0: ID-expand(4) + LinearVector(1024, 64, h=4) fused into one
    #         lane-dense bf16 matmul (all 4 height slices share the same x).
    x = x_ref[...].astype(jnp.bfloat16)                      # (B, 1024)
    y0 = jnp.dot(x, w0_ref[...], preferred_element_type=jnp.float32)
    y0 = jnp.maximum(y0 + b0_ref[...], 0.0)                  # (B, 256) = 4 x 64 lanes

    # --- L1: LinearVector(64, 32, h=4) as one block-diagonal matmul, ReLU,
    #         then MEAN over the 4 height chunks (clamp before aggregate).
    z1 = jnp.dot(y0, w1_ref[...], preferred_element_type=jnp.float32)
    z1 = jnp.maximum(z1 + b1_ref[...], 0.0)                  # (B, 128) = 4 x 32 lanes
    y1 = (z1[:, 0:32] + z1[:, 32:64] + z1[:, 64:96] + z1[:, 96:128]) * 0.25

    # --- L2: F-expand(3) -> [x, sqrt(x+1), log(x+1)] concatenated along lanes,
    #         one block-diagonal matmul, ReLU, MAX over the 3 height chunks.
    #         (Safe only because y1 >= 0: L1 ends in ReLU + MEAN.)
    x2 = jnp.concatenate([y1, jnp.sqrt(y1 + 1.0), jnp.log(y1 + 1.0)], axis=-1)
    z2 = jnp.dot(x2, w2_ref[...], preferred_element_type=jnp.float32)
    z2 = jnp.maximum(z2 + b2_ref[...], 0.0)                  # (B, 96) = 3 x 32 lanes
    y2 = jnp.maximum(jnp.maximum(z2[:, 0:32], z2[:, 32:64]), z2[:, 64:96])

    # --- L3: Linear(32, 16) + ReLU.  (dropout == identity in eval mode)
    y3 = jnp.dot(y2, w3_ref[...], preferred_element_type=jnp.float32)
    y3 = jnp.maximum(y3 + b3_ref[...], 0.0)                  # (B, 16)

    # --- L4: Linear(16, OUT_SIZE), no ReLU.
    y4 = jnp.dot(y3, w4_ref[...], preferred_element_type=jnp.float32)
    o_ref[...] = y4 + b4_ref[...]                            # (B, 10)


def forward_pallas(x_nchw, fused_params):
    B = x_nchw.shape[0]
    x = x_nchw.reshape(B, -1)                                # x.view(x.shape[0], -1)
    vmem = pl.BlockSpec(memory_space=pltpu.MemorySpace.VMEM)
    n_in = 1 + len(fused_params)
    # Whole problem (~0.8 MiB params + tiny activations) fits the default
    # scoped-VMEM limit on v5e/v6e/v7x; no grid is needed at B=2.
    return pl.pallas_call(
        vectornet_kernel,
        out_shape=jax.ShapeDtypeStruct((B, OUT_SIZE), jnp.float32),
        in_specs=[vmem] * n_in,
        out_specs=vmem,
    )(x, *fused_params)


# ----------------------------------------------------------------------------
# Parameter construction (deterministic, PyTorch-Linear-style uniform init),
# kept in the original per-height layout, then packed for the fused kernel.
# ----------------------------------------------------------------------------
def build_raw_params(key):
    heights = [H0, H1, H2, 1, 1]
    params = []
    for i in range(5):
        din, dout, h = WIDTHS[i], WIDTHS[i + 1], heights[i]
        bound = 1.0 / (din ** 0.5)
        key, kw, kb = jax.random.split(key, 3)
        if h > 1:
            w = jax.random.uniform(kw, (h, din, dout), jnp.float32, -bound, bound)
            b = jax.random.uniform(kb, (h, 1, dout), jnp.float32, -bound, bound)
        else:
            w = jax.random.uniform(kw, (din, dout), jnp.float32, -bound, bound)
            b = jax.random.uniform(kb, (1, dout), jnp.float32, -bound, bound)
        params.append((w, b))
    return params


def _block_diag(blocks):
    h = len(blocks)
    din, dout = blocks[0].shape
    out = jnp.zeros((h * din, h * dout), blocks[0].dtype)
    for i, blk in enumerate(blocks):
        out = out.at[i * din:(i + 1) * din, i * dout:(i + 1) * dout].set(blk)
    return out


def pack_fused_params(raw):
    (w0, b0), (w1, b1), (w2, b2), (w3, b3), (w4, b4) = raw
    # L0: identical input per height -> concat weights along the output axis
    #     (lane-dense N=256); bf16 for the MXU (accumulation stays f32).
    w0c = jnp.concatenate([w0[h] for h in range(H0)], axis=1).astype(jnp.bfloat16)
    b0c = jnp.concatenate([b0[h] for h in range(H0)], axis=1)          # (1, 256)
    # L1 / L2: distinct per-height inputs -> block-diagonal weights.
    w1d = _block_diag([w1[h] for h in range(H1)])                      # (256, 128)
    b1c = jnp.concatenate([b1[h] for h in range(H1)], axis=1)          # (1, 128)
    w2d = _block_diag([w2[h] for h in range(H2)])                      # (96, 96)
    b2c = jnp.concatenate([b2[h] for h in range(H2)], axis=1)          # (1, 96)
    return (w0c, b0c, w1d, b1c, w2d, b2c, w3, b3, w4, b4)


# ----------------------------------------------------------------------------
# Plain-JAX reference mirroring the original per-height torch forward
# (with the same bf16 quantization on L0's operands as the kernel).
# ----------------------------------------------------------------------------
def forward_ref(x_nchw, raw):
    B = x_nchw.shape[0]
    x = x_nchw.reshape(B, -1)
    (w0, b0), (w1, b1), (w2, b2), (w3, b3), (w4, b4) = raw

    # L0: Expand(ID, 4) -> LinearVector(1024, 64, h=4) -> clamp(0)
    xb = x.astype(jnp.bfloat16)
    ys = [jnp.maximum(jnp.dot(xb, w0[h].astype(jnp.bfloat16),
                              preferred_element_type=jnp.float32) + b0[h], 0.0)
          for h in range(H0)]
    # L1: LinearVector(64, 32, h=4) -> clamp(0) -> MEAN over height
    zs = [jnp.maximum(ys[h] @ w1[h] + b1[h], 0.0) for h in range(H1)]
    x = sum(zs) / float(H1)
    # L2: Expand(F, 3) -> LinearVector(32, 32, h=3) -> clamp(0) -> MAX over height
    es = [x, jnp.sqrt(x + 1.0), jnp.log(x + 1.0)]
    zs = [jnp.maximum(es[h] @ w2[h] + b2[h], 0.0) for h in range(H2)]
    x = functools.reduce(jnp.maximum, zs)
    # L3: Linear(32, 16) -> clamp(0)
    x = jnp.maximum(x @ w3 + b3, 0.0)
    # L4: Linear(16, OUT_SIZE)
    return x @ w4 + b4


if __name__ == "__main__":
    key = jax.random.PRNGKey(0)
    key, kx, kp = jax.random.split(key, 3)

    # Input consistent with an NCHW conv-style tensor that forward() flattens.
    x = jax.random.normal(kx, (2, 4, 16, 16), dtype=jnp.float32)
    raw_params = build_raw_params(kp)
    fused_params = pack_fused_params(raw_params)

    out = jax.block_until_ready(forward_pallas(x, fused_params))
    ref = forward_ref(x, raw_params)

    assert out.shape == (2, OUT_SIZE), out.shape
    assert jnp.allclose(out, ref, atol=1e-3, rtol=1e-3), (
        float(jnp.max(jnp.abs(out - ref))))

    print("KERNEL_OK")
</pallas_src>

<mosaic_0001>
module attributes {stable_mosaic.version = 11 : i64} {
  func.func @vectornet_kernel(%arg0: memref<2x1024xf32, #tpu.memory_space<vmem>>, %arg1: memref<1024x256xbf16, #tpu.memory_space<vmem>>, %arg2: memref<1x256xf32, #tpu.memory_space<vmem>>, %arg3: memref<256x128xf32, #tpu.memory_space<vmem>>, %arg4: memref<1x128xf32, #tpu.memory_space<vmem>>, %arg5: memref<96x96xf32, #tpu.memory_space<vmem>>, %arg6: memref<1x96xf32, #tpu.memory_space<vmem>>, %arg7: memref<32x16xf32, #tpu.memory_space<vmem>>, %arg8: memref<1x16xf32, #tpu.memory_space<vmem>>, %arg9: memref<16x10xf32, #tpu.memory_space<vmem>>, %arg10: memref<1x10xf32, #tpu.memory_space<vmem>>, %arg11: memref<2x10xf32, #tpu.memory_space<vmem>>) attributes {dimension_semantics = [], scalar_prefetch = 0 : i64, scratch_operands = 0 : i64, tpu.core_type = #tpu.core_type<tc>} {
    %c0 = arith.constant 0 : index
    %c0_0 = arith.constant 0 : index
    %0 = vector.load %arg0[%c0, %c0_0] : memref<2x1024xf32, #tpu.memory_space<vmem>>, vector<2x1024xf32>
    %1 = arith.truncf %0 : vector<2x1024xf32> to vector<2x1024xbf16>
    %c0_1 = arith.constant 0 : index
    %c0_2 = arith.constant 0 : index
    %2 = vector.load %arg1[%c0_1, %c0_2] : memref<1024x256xbf16, #tpu.memory_space<vmem>>, vector<1024x256xbf16>
    %cst = arith.constant dense<0.000000e+00> : vector<2x256xf32>
    %3 = tpu.matmul %1, %2, %cst {dimension_numbers = #tpu.dot_dimension_numbers<[1], [0], [0], [1], [0, 0, 1, 1], [], []>} : vector<2x1024xbf16>, vector<1024x256xbf16>, vector<2x256xf32> -> vector<2x256xf32>
    %c0_3 = arith.constant 0 : index
    %c0_4 = arith.constant 0 : index
    %4 = vector.load %arg2[%c0_3, %c0_4] : memref<1x256xf32, #tpu.memory_space<vmem>>, vector<1x256xf32>
    %5 = vector.broadcast %4 : vector<1x256xf32> to vector<2x256xf32>
    %6 = arith.addf %3, %5 : vector<2x256xf32>
    %cst_5 = arith.constant 0.000000e+00 : f32
    %7 = vector.broadcast %cst_5 : f32 to vector<2x256xf32>
    %8 = arith.maximumf %6, %7 : vector<2x256xf32>
    %c0_6 = arith.constant 0 : index
    %c0_7 = arith.constant 0 : index
    %9 = vector.load %arg3[%c0_6, %c0_7] : memref<256x128xf32, #tpu.memory_space<vmem>>, vector<256x128xf32>
    %cst_8 = arith.constant dense<0.000000e+00> : vector<2x128xf32>
    %10 = tpu.matmul %8, %9, %cst_8 {dimension_numbers = #tpu.dot_dimension_numbers<[1], [0], [0], [1], [0, 0, 1, 1], [], []>} : vector<2x256xf32>, vector<256x128xf32>, vector<2x128xf32> -> vector<2x128xf32>
    %c0_9 = arith.constant 0 : index
    %c0_10 = arith.constant 0 : index
    %11 = vector.load %arg4[%c0_9, %c0_10] : memref<1x128xf32, #tpu.memory_space<vmem>>, vector<1x128xf32>
    %12 = vector.broadcast %11 : vector<1x128xf32> to vector<2x128xf32>
    %13 = arith.addf %10, %12 : vector<2x128xf32>
    %cst_11 = arith.constant 0.000000e+00 : f32
    %14 = vector.broadcast %cst_11 : f32 to vector<2x128xf32>
    %15 = arith.maximumf %13, %14 : vector<2x128xf32>
    %16 = vector.extract_strided_slice %15 {offsets = [0, 0], sizes = [2, 32], strides = [1, 1]} : vector<2x128xf32> to vector<2x32xf32>
    %17 = vector.extract_strided_slice %15 {offsets = [0, 32], sizes = [2, 32], strides = [1, 1]} : vector<2x128xf32> to vector<2x32xf32>
    %18 = arith.addf %16, %17 : vector<2x32xf32>
    %19 = vector.extract_strided_slice %15 {offsets = [0, 64], sizes = [2, 32], strides = [1, 1]} : vector<2x128xf32> to vector<2x32xf32>
    %20 = arith.addf %18, %19 : vector<2x32xf32>
    %21 = vector.extract_strided_slice %15 {offsets = [0, 96], sizes = [2, 32], strides = [1, 1]} : vector<2x128xf32> to vector<2x32xf32>
    %22 = arith.addf %20, %21 : vector<2x32xf32>
    %cst_12 = arith.constant 2.500000e-01 : f32
    %23 = vector.broadcast %cst_12 : f32 to vector<2x32xf32>
    %24 = arith.mulf %22, %23 : vector<2x32xf32>
    %cst_13 = arith.constant 1.000000e+00 : f32
    %25 = vector.broadcast %cst_13 : f32 to vector<2x32xf32>
    %26 = arith.addf %24, %25 : vector<2x32xf32>
    %27 = math.sqrt %26 : vector<2x32xf32>
    %cst_14 = arith.constant 1.000000e+00 : f32
    %28 = vector.broadcast %cst_14 : f32 to vector<2x32xf32>
    %29 = arith.addf %24, %28 : vector<2x32xf32>
    %30 = math.log %29 : vector<2x32xf32>
    %31 = tpu.concatenate %24, %27, %30 in 1 : vector<2x32xf32>, vector<2x32xf32>, vector<2x32xf32> -> vector<2x96xf32>
    %c0_15 = arith.constant 0 : index
    %c0_16 = arith.constant 0 : index
    %32 = vector.load %arg5[%c0_15, %c0_16] : memref<96x96xf32, #tpu.memory_space<vmem>>, vector<96x96xf32>
    %cst_17 = arith.constant dense<0.000000e+00> : vector<2x96xf32>
    %33 = tpu.matmul %31, %32, %cst_17 {dimension_numbers = #tpu.dot_dimension_numbers<[1], [0], [0], [1], [0, 0, 1, 1], [], []>} : vector<2x96xf32>, vector<96x96xf32>, vector<2x96xf32> -> vector<2x96xf32>
    %c0_18 = arith.constant 0 : index
    %c0_19 = arith.constant 0 : index
    %34 = vector.load %arg6[%c0_18, %c0_19] : memref<1x96xf32, #tpu.memory_space<vmem>>, vector<1x96xf32>
    %35 = vector.broadcast %34 : vector<1x96xf32> to vector<2x96xf32>
    %36 = arith.addf %33, %35 : vector<2x96xf32>
    %cst_20 = arith.constant 0.000000e+00 : f32
    %37 = vector.broadcast %cst_20 : f32 to vector<2x96xf32>
    %38 = arith.maximumf %36, %37 : vector<2x96xf32>
    %39 = vector.extract_strided_slice %38 {offsets = [0, 0], sizes = [2, 32], strides = [1, 1]} : vector<2x96xf32> to vector<2x32xf32>
    %40 = vector.extract_strided_slice %38 {offsets = [0, 32], sizes = [2, 32], strides = [1, 1]} : vector<2x96xf32> to vector<2x32xf32>
    %41 = arith.maximumf %39, %40 : vector<2x32xf32>
    %42 = vector.extract_strided_slice %38 {offsets = [0, 64], sizes = [2, 32], strides = [1, 1]} : vector<2x96xf32> to vector<2x32xf32>
    %43 = arith.maximumf %41, %42 : vector<2x32xf32>
    %c0_21 = arith.constant 0 : index
    %c0_22 = arith.constant 0 : index
    %44 = vector.load %arg7[%c0_21, %c0_22] : memref<32x16xf32, #tpu.memory_space<vmem>>, vector<32x16xf32>
    %cst_23 = arith.constant dense<0.000000e+00> : vector<2x16xf32>
    %45 = tpu.matmul %43, %44, %cst_23 {dimension_numbers = #tpu.dot_dimension_numbers<[1], [0], [0], [1], [0, 0, 1, 1], [], []>} : vector<2x32xf32>, vector<32x16xf32>, vector<2x16xf32> -> vector<2x16xf32>
    %c0_24 = arith.constant 0 : index
    %c0_25 = arith.constant 0 : index
    %46 = vector.load %arg8[%c0_24, %c0_25] : memref<1x16xf32, #tpu.memory_space<vmem>>, vector<1x16xf32>
    %47 = vector.broadcast %46 : vector<1x16xf32> to vector<2x16xf32>
    %48 = arith.addf %45, %47 : vector<2x16xf32>
    %cst_26 = arith.constant 0.000000e+00 : f32
    %49 = vector.broadcast %cst_26 : f32 to vector<2x16xf32>
    %50 = arith.maximumf %48, %49 : vector<2x16xf32>
    %c0_27 = arith.constant 0 : index
    %c0_28 = arith.constant 0 : index
    %51 = vector.load %arg9[%c0_27, %c0_28] : memref<16x10xf32, #tpu.memory_space<vmem>>, vector<16x10xf32>
    %cst_29 = arith.constant dense<0.000000e+00> : vector<2x10xf32>
    %52 = tpu.matmul %50, %51, %cst_29 {dimension_numbers = #tpu.dot_dimension_numbers<[1], [0], [0], [1], [0, 0, 1, 1], [], []>} : vector<2x16xf32>, vector<16x10xf32>, vector<2x10xf32> -> vector<2x10xf32>
    %c0_30 = arith.constant 0 : index
    %c0_31 = arith.constant 0 : index
    %53 = vector.load %arg10[%c0_30, %c0_31] : memref<1x10xf32, #tpu.memory_space<vmem>>, vector<1x10xf32>
    %54 = vector.broadcast %53 : vector<1x10xf32> to vector<2x10xf32>
    %55 = arith.addf %52, %54 : vector<2x10xf32>
    %c0_32 = arith.constant 0 : index
    %c0_33 = arith.constant 0 : index
    %56 = vector.load %arg11[%c0_32, %c0_33] : memref<2x10xf32, #tpu.memory_space<vmem>>, vector<2x10xf32>
    tpu.vector_store %arg11[%c0_32, %c0_33], %55 {strides = array<i32>} : memref<2x10xf32, #tpu.memory_space<vmem>>, vector<2x10xf32>,
    return
  }
}

</mosaic_0001>

<llo_original>
// kernel: tpu_custom_call.1
$region0: #{tpu_custom_call.1}
  #allocation0 [shape = 'u32[]', space=smem, size = 0x4, offset = 0x4, fixed_abs, tag = 'smem constant byte address 0x4 - core index']
  #allocation1 [shape = 'u32[72,128]{1,0:T(1,128)}', space=vmem, size = 0x9000, scoped, tag = 'internal scratch']
  %s0 = inlined_call_operand.vmem [shape: f32[2,1024], index: 0, kind: input, shape index: {}]
  %s1 = inlined_call_operand.hbm [shape: bf16[1024,256], index: 1, kind: input, shape index: {}]
  %s2 = inlined_call_operand.vmem [shape: f32[1,256], index: 2, kind: input, shape index: {}]
  %s3 = inlined_call_operand.hbm [shape: f32[256,128], index: 3, kind: input, shape index: {}]
  %s4 = inlined_call_operand.vmem [shape: f32[1,128], index: 4, kind: input, shape index: {}]
  %s5 = inlined_call_operand.hbm [shape: f32[96,96], index: 5, kind: input, shape index: {}]
  %s6 = inlined_call_operand.vmem [shape: f32[1,96], index: 6, kind: input, shape index: {}]
  %s7 = inlined_call_operand.vmem [shape: f32[32,16], index: 7, kind: input, shape index: {}]
  %s8 = inlined_call_operand.vmem [shape: f32[1,16], index: 8, kind: input, shape index: {}]
  %s9 = inlined_call_operand.vmem [shape: f32[16,10], index: 9, kind: input, shape index: {}]
  %s10 = inlined_call_operand.vmem [shape: f32[1,10], index: 10, kind: input, shape index: {}]
  %s11 = inlined_call_operand.hbm [shape: f32[2,10], index: 11, kind: output, shape index: {}]
  %s12 = sld [smem:[#allocation0]]
  $region66: #{tpu_custom_call.1} parent=0
    _
  %s14 = ssub.s32 1, %s12
  %s15 = scalar_select 0, %s14, %s12
  $region1: #{tpu_custom_call.1} parent=0
    #allocation2 [shape = 'u8[524288]{0}', space=vmem, size = 0x80000, scoped, tag = 'input window, operand 1, single buffered']
    #allocation3 [shape = 's32[1]{0}', space=sflag, size = 0x4, scoped, tag = 'scoped memory for tpu_custom_call.1']
    #allocation4 [shape = 's32[1]{0}', space=sflag, size = 0x4, scoped, tag = 'scoped memory for tpu_custom_call.1']
    #allocation5 [shape = 'u8[131072]{0}', space=vmem, size = 0x20000, scoped, tag = 'input window, operand 3, single buffered']
    #allocation6 [shape = 's32[1]{0}', space=sflag, size = 0x4, scoped, tag = 'scoped memory for tpu_custom_call.1']
    #allocation7 [shape = 'u8[49152]{0}', space=vmem, size = 0xc000, scoped, tag = 'input window, operand 5, single buffered']
    #allocation8 [shape = 'u8[1024]{0}', space=vmem, size = 0x400, scoped, tag = 'output window, operand 0, single buffered']
    %16 = vsyncpa [#allocation3], 0
    %17 = vsyncpa [#allocation6], 0
    %18 = vsyncpa [#allocation4], 0
    // Predicated region
    $region2: #{tpu_custom_call.1} parent=1 // pred_check
      _
    $region3: #{tpu_custom_call.1} parent=1 // pred_check_branch
      %20 = sbr.rel (0) target = $region5
    $region4: #{tpu_custom_call.1} parent=1 // pred_region
      _
    $region5: #{tpu_custom_call.1} parent=1 // pred_fallthru
      _
    // Predicated region
    $region6: #{tpu_custom_call.1} parent=1 // pred_check
      _
    $region7: #{tpu_custom_call.1} parent=1 // pred_check_branch
      %22 = sbr.rel (0) target = $region9
    $region8: #{tpu_custom_call.1} parent=1 // pred_region
      %24 = vsyncadd [#allocation3], 0
      %s25 = sshll.u32 %s1, 4
      %s26 = int_to_ptr.hbm [resolvable:$true] %s25
      %s27 = sshll.u32 [#allocation2], 4
      %s28 = int_to_ptr.vmem [resolvable:$true] %s27
      %33 = dma.hbm_to_vmem [thread:$0]  %s26, 16384, %s28, [#allocation3], 128, 128, 8
    $region9: #{tpu_custom_call.1} parent=1 // pred_fallthru
      _
    // Predicated region
    $region10: #{tpu_custom_call.1} parent=1 // pred_check
      _
    $region11: #{tpu_custom_call.1} parent=1 // pred_check_branch
      %35 = sbr.rel (0) target = $region13
    $region12: #{tpu_custom_call.1} parent=1 // pred_region
      _
    $region13: #{tpu_custom_call.1} parent=1 // pred_fallthru
      _
    // Predicated region
    $region14: #{tpu_custom_call.1} parent=1 // pred_check
      _
    $region15: #{tpu_custom_call.1} parent=1 // pred_check_branch
      %37 = sbr.rel (0) target = $region17
    $region16: #{tpu_custom_call.1} parent=1 // pred_region
      %39 = vsyncadd [#allocation6], 0
      %s40 = sshll.u32 %s3, 4
      %s41 = int_to_ptr.hbm [resolvable:$true] %s40
      %s42 = sshll.u32 [#allocation5], 4
      %s43 = int_to_ptr.vmem [resolvable:$true] %s42
      %48 = dma.hbm_to_vmem [thread:$0]  %s41, 4096, %s43, [#allocation6], 128, 128, 8
    $region17: #{tpu_custom_call.1} parent=1 // pred_fallthru
      _
    // Predicated region
    $region18: #{tpu_custom_call.1} parent=1 // pred_check
      _
    $region19: #{tpu_custom_call.1} parent=1 // pred_check_branch
      %50 = sbr.rel (0) target = $region21
    $region20: #{tpu_custom_call.1} parent=1 // pred_region
      _
    $region21: #{tpu_custom_call.1} parent=1 // pred_fallthru
      _
    // Predicated region
    $region22: #{tpu_custom_call.1} parent=1 // pred_check
      _
    $region23: #{tpu_custom_call.1} parent=1 // pred_check_branch
      %52 = sbr.rel (0) target = $region25
    $region24: #{tpu_custom_call.1} parent=1 // pred_region
      %54 = vsyncadd [#allocation6], 0
      %s55 = sshll.u32 %s5, 4
      %s56 = int_to_ptr.hbm [resolvable:$true] %s55
      %s57 = sshll.u32 [#allocation7], 4
      %s58 = int_to_ptr.vmem [resolvable:$true] %s57
      %63 = dma.hbm_to_vmem [thread:$0]  %s56, 1536, %s58, [#allocation6], 128, 128, 8
    $region25: #{tpu_custom_call.1} parent=1 // pred_fallthru
      _
    // Predicated region
    $region26: #{tpu_custom_call.1} parent=1 // pred_check
      _
    $region27: #{tpu_custom_call.1} parent=1 // pred_check_branch
      %65 = sbr.rel (0) target = $region29
    $region28: #{tpu_custom_call.1} parent=1 // pred_region
      _
    $region29: #{tpu_custom_call.1} parent=1 // pred_fallthru
      _
    // Predicated region
    $region30: #{tpu_custom_call.1} parent=1 // pred_check
      _
    $region31: #{tpu_custom_call.1} parent=1 // pred_check_branch
      %67 = sbr.rel (0) target = $region33
    $region32: #{tpu_custom_call.1} parent=1 // pred_region
      _
    $region33: #{tpu_custom_call.1} parent=1 // pred_fallthru
      _
    // Predicated region
    $region34: #{tpu_custom_call.1} parent=1 // pred_check
      _
    $region35: #{tpu_custom_call.1} parent=1 // pred_check_branch
      %69 = sbr.rel (0) target = $region37
    $region36: #{tpu_custom_call.1} parent=1 // pred_region
      _
    $region37: #{tpu_custom_call.1} parent=1 // pred_fallthru
      _
    // Predicated region
    $region38: #{tpu_custom_call.1} parent=1 // pred_check
      _
    $region39: #{tpu_custom_call.1} parent=1 // pred_check_branch
      %71 = sbr.rel (0) target = $region41
    $region40: #{tpu_custom_call.1} parent=1 // pred_region
      _
    $region41: #{tpu_custom_call.1} parent=1 // pred_fallthru
      _
    // Predicated region
    $region42: #{tpu_custom_call.1} parent=1 // pred_check
      _
    $region43: #{tpu_custom_call.1} parent=1 // pred_check_branch
      %73 = sbr.rel (0) target = $region45
    $region44: #{tpu_custom_call.1} parent=1 // pred_region
      _
    $region45: #{tpu_custom_call.1} parent=1 // pred_fallthru
      _
    // Predicated region
    $region46: #{tpu_custom_call.1} parent=1 // pred_check
      _
    $region47: #{tpu_custom_call.1} parent=1 // pred_check_branch
      %75 = sbr.rel (0) target = $region49
    $region48: #{tpu_custom_call.1} parent=1 // pred_region
      %77 = dma.done [#allocation3], 16384
    $region49: #{tpu_custom_call.1} parent=1 // pred_fallthru
      _
    // Predicated region
    $region50: #{tpu_custom_call.1} parent=1 // pred_check
      _
    $region51: #{tpu_custom_call.1} parent=1 // pred_check_branch
      %79 = sbr.rel (0) target = $region53
    $region52: #{tpu_custom_call.1} parent=1 // pred_region
      %81 = dma.done [#allocation6], 4096
    $region53: #{tpu_custom_call.1} parent=1 // pred_fallthru
      _
    // Predicated region
    $region54: #{tpu_custom_call.1} parent=1 // pred_check
      _
    $region55: #{tpu_custom_call.1} parent=1 // pred_check_branch
      %83 = sbr.rel (0) target = $region57
    $region56: #{tpu_custom_call.1} parent=1 // pred_region
      %85 = dma.done [#allocation6], 1536
    $region57: #{tpu_custom_call.1} parent=1 // pred_fallthru
      _
    %v86 = vld [vmem:[%s0] sm:$0xff]
    %v87 = vld [vmem:[%s0 + $0x8] sm:$0xff]
    %90 = vst [vmem:[#allocation1] ss:$4 sm:$0xff] %v86
    %s91 = scalar_lea.vmem [#allocation1], 32
    %92 = vst [vmem:[%s91] ss:$4 sm:$0xff] %v87
    %v93 = vld.sshfl [vmem:[#allocation1] sm:$0xff pattern:$0x73625140]
    %v94 = vld.sshfl [vmem:[#allocation1 + $0x8] sm:$0xff pattern:$0x73625140]
    %v95 = vld.sshfl [vmem:[#allocation1 + $0x10] sm:$0xff pattern:$0x73625140]
    %v96 = vld.sshfl [vmem:[#allocation1 + $0x18] sm:$0xff pattern:$0x73625140]
    %v97 = vld.sshfl [vmem:[#allocation1 + $0x20] sm:$0xff pattern:$0x73625140]
    %v98 = vld.sshfl [vmem:[#allocation1 + $0x28] sm:$0xff pattern:$0x73625140]
    %v99 = vld.sshfl [vmem:[#allocation1 + $0x30] sm:$0xff pattern:$0x73625140]
    %v100 = vld.sshfl [vmem:[#allocation1 + $0x38] sm:$0xff pattern:$0x73625140]
    %v109 = vpack.c.bf16 %v93, %v93
    %v110 = vpack.c.bf16 %v94, %v94
    %v111 = vpack.c.bf16 %v95, %v95
    %v112 = vpack.c.bf16 %v96, %v96
    %v113 = vpack.c.bf16 %v97, %v97
    %v114 = vpack.c.bf16 %v98, %v98
    %v115 = vpack.c.bf16 %v99, %v99
    %v116 = vpack.c.bf16 %v100, %v100
    %v117 = vld [vmem:[#allocation2] sm:$0xff]
    %v118 = vld [vmem:[#allocation2 + $0x8] sm:$0xff]
    %v119 = vld [vmem:[#allocation2 + $0x10] sm:$0xff]
    %v120 = vld [vmem:[#allocation2 + $0x18] sm:$0xff]
    %v121 = vld [vmem:[#allocation2 + $0x20] sm:$0xff]
    %v122 = vld [vmem:[#allocation2 + $0x28] sm:$0xff]
    %v123 = vld [vmem:[#allocation2 + $0x30] sm:$0xff]
    %v124 = vld [vmem:[#allocation2 + $0x38] sm:$0xff]
    %v125 = vld [vmem:[#allocation2 + $0x40] sm:$0xff]
    %v126 = vld [vmem:[#allocation2 + $0x48] sm:$0xff]
    %v127 = vld [vmem:[#allocation2 + $0x50] sm:$0xff]
    %v128 = vld [vmem:[#allocation2 + $0x58] sm:$0xff]
    %v129 = vld [vmem:[#allocation2 + $0x60] sm:$0xff]
    %v130 = vld [vmem:[#allocation2 + $0x68] sm:$0xff]
    %v131 = vld [vmem:[#allocation2 + $0x70] sm:$0xff]
    %v132 = vld [vmem:[#allocation2 + $0x78] sm:$0xff]
    %v133 = vld [vmem:[#allocation2 + $0x80] sm:$0xff]
    %v134 = vld [vmem:[#allocation2 + $0x88] sm:$0xff]
    %v135 = vld [vmem:[#allocation2 + $0x90] sm:$0xff]
    %v136 = vld [vmem:[#allocation2 + $0x98] sm:$0xff]
    %v137 = vld [vmem:[#allocation2 + $0xa0] sm:$0xff]
    %v138 = vld [vmem:[#allocation2 + $0xa8] sm:$0xff]
    %v139 = vld [vmem:[#allocation2 + $0xb0] sm:$0xff]
    %v140 = vld [vmem:[#allocation2 + $0xb8] sm:$0xff]
    %v141 = vld [vmem:[#allocation2 + $0xc0] sm:$0xff]
    %v142 = vld [vmem:[#allocation2 + $0xc8] sm:$0xff]
    %v143 = vld [vmem:[#allocation2 + $0xd0] sm:$0xff]
    %v144 = vld [vmem:[#allocation2 + $0xd8] sm:$0xff]
    %v145 = vld [vmem:[#allocation2 + $0xe0] sm:$0xff]
    %v146 = vld [vmem:[#allocation2 + $0xe8] sm:$0xff]
    %v147 = vld [vmem:[#allocation2 + $0xf0] sm:$0xff]
    %v148 = vld [vmem:[#allocation2 + $0xf8] sm:$0xff]
    %v149 = vld [vmem:[#allocation2 + $0x100] sm:$0xff]
    %v150 = vld [vmem:[#allocation2 + $0x108] sm:$0xff]
    %v151 = vld [vmem:[#allocation2 + $0x110] sm:$0xff]
    %v152 = vld [vmem:[#allocation2 + $0x118] sm:$0xff]
    %v153 = vld [vmem:[#allocation2 + $0x120] sm:$0xff]
    %v154 = vld [vmem:[#allocation2 + $0x128] sm:$0xff]
    %v155 = vld [vmem:[#allocation2 + $0x130] sm:$0xff]
    %v156 = vld [vmem:[#allocation2 + $0x138] sm:$0xff]
    %v157 = vld [vmem:[#allocation2 + $0x140] sm:$0xff]
    %v158 = vld [vmem:[#allocation2 + $0x148] sm:$0xff]
    %v159 = vld [vmem:[#allocation2 + $0x150] sm:$0xff]
    %v160 = vld [vmem:[#allocation2 + $0x158] sm:$0xff]
    %v161 = vld [vmem:[#allocation2 + $0x160] sm:$0xff]
    %v162 = vld [vmem:[#allocation2 + $0x168] sm:$0xff]
    %v163 = vld [vmem:[#allocation2 + $0x170] sm:$0xff]
    %v164 = vld [vmem:[#allocation2 + $0x178] sm:$0xff]
    %v165 = vld [vmem:[#allocation2 + $0x180] sm:$0xff]
    %v166 = vld [vmem:[#allocation2 + $0x188] sm:$0xff]
    %v167 = vld [vmem:[#allocation2 + $0x190] sm:$0xff]
    %v168 = vld [vmem:[#allocation2 + $0x198] sm:$0xff]
    %v169 = vld [vmem:[#allocation2 + $0x1a0] sm:$0xff]
    %v170 = vld [vmem:[#allocation2 + $0x1a8] sm:$0xff]
    %v171 = vld [vmem:[#allocation2 + $0x1b0] sm:$0xff]
    %v172 = vld [vmem:[#allocation2 + $0x1b8] sm:$0xff]
    %v173 = vld [vmem:[#allocation2 + $0x1c0] sm:$0xff]
    %v174 = vld [vmem:[#allocation2 + $0x1c8] sm:$0xff]
    %v175 = vld [vmem:[#allocation2 + $0x1d0] sm:$0xff]
    %v176 = vld [vmem:[#allocation2 + $0x1d8] sm:$0xff]
    %v177 = vld [vmem:[#allocation2 + $0x1e0] sm:$0xff]
    %v178 = vld [vmem:[#allocation2 + $0x1e8] sm:$0xff]
    %v179 = vld [vmem:[#allocation2 + $0x1f0] sm:$0xff]
    %v180 = vld [vmem:[#allocation2 + $0x1f8] sm:$0xff]
    %v181 = vld [vmem:[#allocation2 + $0x200] sm:$0xff]
    %v182 = vld [vmem:[#allocation2 + $0x208] sm:$0xff]
    %v183 = vld [vmem:[#allocation2 + $0x210] sm:$0xff]
    %v184 = vld [vmem:[#allocation2 + $0x218] sm:$0xff]
    %v185 = vld [vmem:[#allocation2 + $0x220] sm:$0xff]
    %v186 = vld [vmem:[#allocation2 + $0x228] sm:$0xff]
    %v187 = vld [vmem:[#allocation2 + $0x230] sm:$0xff]
    %v188 = vld [vmem:[#allocation2 + $0x238] sm:$0xff]
    %v189 = vld [vmem:[#allocation2 + $0x240] sm:$0xff]
    %v190 = vld [vmem:[#allocation2 + $0x248] sm:$0xff]
    %v191 = vld [vmem:[#allocation2 + $0x250] sm:$0xff]
    %v192 = vld [vmem:[#allocation2 + $0x258] sm:$0xff]
    %v193 = vld [vmem:[#allocation2 + $0x260] sm:$0xff]
    %v194 = vld [vmem:[#allocation2 + $0x268] sm:$0xff]
    %v195 = vld [vmem:[#allocation2 + $0x270] sm:$0xff]
    %v196 = vld [vmem:[#allocation2 + $0x278] sm:$0xff]
    %v197 = vld [vmem:[#allocation2 + $0x280] sm:$0xff]
    %v198 = vld [vmem:[#allocation2 + $0x288] sm:$0xff]
    %v199 = vld [vmem:[#allocation2 + $0x290] sm:$0xff]
    %v200 = vld [vmem:[#allocation2 + $0x298] sm:$0xff]
    %v201 = vld [vmem:[#allocation2 + $0x2a0] sm:$0xff]
    %v202 = vld [vmem:[#allocation2 + $0x2a8] sm:$0xff]
    %v203 = vld [vmem:[#allocation2 + $0x2b0] sm:$0xff]
    %v204 = vld [vmem:[#allocation2 + $0x2b8] sm:$0xff]
    %v205 = vld [vmem:[#allocation2 + $0x2c0] sm:$0xff]
    %v206 = vld [vmem:[#allocation2 + $0x2c8] sm:$0xff]
    %v207 = vld [vmem:[#allocation2 + $0x2d0] sm:$0xff]
    %v208 = vld [vmem:[#allocation2 + $0x2d8] sm:$0xff]
    %v209 = vld [vmem:[#allocation2 + $0x2e0] sm:$0xff]
    %v210 = vld [vmem:[#allocation2 + $0x2e8] sm:$0xff]
    %v211 = vld [vmem:[#allocation2 + $0x2f0] sm:$0xff]
    %v212 = vld [vmem:[#allocation2 + $0x2f8] sm:$0xff]
    %v213 = vld [vmem:[#allocation2 + $0x300] sm:$0xff]
    %v214 = vld [vmem:[#allocation2 + $0x308] sm:$0xff]
    %v215 = vld [vmem:[#allocation2 + $0x310] sm:$0xff]
    %v216 = vld [vmem:[#allocation2 + $0x318] sm:$0xff]
    %v217 = vld [vmem:[#allocation2 + $0x320] sm:$0xff]
    %v218 = vld [vmem:[#allocation2 + $0x328] sm:$0xff]
    %v219 = vld [vmem:[#allocation2 + $0x330] sm:$0xff]
    %v220 = vld [vmem:[#allocation2 + $0x338] sm:$0xff]
    %v221 = vld [vmem:[#allocation2 + $0x340] sm:$0xff]
    %v222 = vld [vmem:[#allocation2 + $0x348] sm:$0xff]
    %v223 = vld [vmem:[#allocation2 + $0x350] sm:$0xff]
    %v224 = vld [vmem:[#allocation2 + $0x358] sm:$0xff]
    %v225 = vld [vmem:[#allocation2 + $0x360] sm:$0xff]
    %v226 = vld [vmem:[#allocation2 + $0x368] sm:$0xff]
    %v227 = vld [vmem:[#allocation2 + $0x370] sm:$0xff]
    %v228 = vld [vmem:[#allocation2 + $0x378] sm:$0xff]
    %v229 = vld [vmem:[#allocation2 + $0x380] sm:$0xff]
    %v230 = vld [vmem:[#allocation2 + $0x388] sm:$0xff]
    %v231 = vld [vmem:[#allocation2 + $0x390] sm:$0xff]
    %v232 = vld [vmem:[#allocation2 + $0x398] sm:$0xff]
    %v233 = vld [vmem:[#allocation2 + $0x3a0] sm:$0xff]
    %v234 = vld [vmem:[#allocation2 + $0x3a8] sm:$0xff]
    %v235 = vld [vmem:[#allocation2 + $0x3b0] sm:$0xff]
    %v236 = vld [vmem:[#allocation2 + $0x3b8] sm:$0xff]
    %v237 = vld [vmem:[#allocation2 + $0x3c0] sm:$0xff]
    %v238 = vld [vmem:[#allocation2 + $0x3c8] sm:$0xff]
    %v239 = vld [vmem:[#allocation2 + $0x3d0] sm:$0xff]
    %v240 = vld [vmem:[#allocation2 + $0x3d8] sm:$0xff]
    %v241 = vld [vmem:[#allocation2 + $0x3e0] sm:$0xff]
    %v242 = vld [vmem:[#allocation2 + $0x3e8] sm:$0xff]
    %v243 = vld [vmem:[#allocation2 + $0x3f0] sm:$0xff]
    %v244 = vld [vmem:[#allocation2 + $0x3f8] sm:$0xff]
    %v245 = vld [vmem:[%s2] sm:$0x3]
    %v247 = vperm.slane %v245, 0
    %v248 = vperm.slane %v245, 1
    %v379 = vunpack.c.l.b16 %v117
    %v380 = vunpack.c.h.b16 %v117
    %v381 = vunpack.c.l.b16 %v118
    %v382 = vunpack.c.h.b16 %v118
    %v383 = vunpack.c.l.b16 %v119
    %v384 = vunpack.c.h.b16 %v119
    %v385 = vunpack.c.l.b16 %v120
    %v386 = vunpack.c.h.b16 %v120
    %v387 = vunpack.c.l.b16 %v121
    %v388 = vunpack.c.h.b16 %v121
    %v389 = vunpack.c.l.b16 %v122
    %v390 = vunpack.c.h.b16 %v122
    %v391 = vunpack.c.l.b16 %v123
    %v392 = vunpack.c.h.b16 %v123
    %v393 = vunpack.c.l.b16 %v124
    %v394 = vunpack.c.h.b16 %v124
    %v395 = vunpack.c.l.b16 %v125
    %v396 = vunpack.c.h.b16 %v125
    %v397 = vunpack.c.l.b16 %v126
    %v398 = vunpack.c.h.b16 %v126
    %v399 = vunpack.c.l.b16 %v127
    %v400 = vunpack.c.h.b16 %v127
    %v401 = vunpack.c.l.b16 %v128
    %v402 = vunpack.c.h.b16 %v128
    %v403 = vunpack.c.l.b16 %v129
    %v404 = vunpack.c.h.b16 %v129
    %v405 = vunpack.c.l.b16 %v130
    %v406 = vunpack.c.h.b16 %v130
    %v407 = vunpack.c.l.b16 %v131
    %v408 = vunpack.c.h.b16 %v131
    %v409 = vunpack.c.l.b16 %v132
    %v410 = vunpack.c.h.b16 %v132
    %v411 = vunpack.c.l.b16 %v133
    %v412 = vunpack.c.h.b16 %v133
    %v413 = vunpack.c.l.b16 %v134
    %v414 = vunpack.c.h.b16 %v134
    %v415 = vunpack.c.l.b16 %v135
    %v416 = vunpack.c.h.b16 %v135
    %v417 = vunpack.c.l.b16 %v136
    %v418 = vunpack.c.h.b16 %v136
    %v419 = vunpack.c.l.b16 %v137
    %v420 = vunpack.c.h.b16 %v137
    %v421 = vunpack.c.l.b16 %v138
    %v422 = vunpack.c.h.b16 %v138
    %v423 = vunpack.c.l.b16 %v139
    %v424 = vunpack.c.h.b16 %v139
    %v425 = vunpack.c.l.b16 %v140
    %v426 = vunpack.c.h.b16 %v140
    %v427 = vunpack.c.l.b16 %v141
    %v428 = vunpack.c.h.b16 %v141
    %v429 = vunpack.c.l.b16 %v142
    %v430 = vunpack.c.h.b16 %v142
    %v431 = vunpack.c.l.b16 %v143
    %v432 = vunpack.c.h.b16 %v143
    %v433 = vunpack.c.l.b16 %v144
    %v434 = vunpack.c.h.b16 %v144
    %v435 = vunpack.c.l.b16 %v145
    %v436 = vunpack.c.h.b16 %v145
    %v437 = vunpack.c.l.b16 %v146
    %v438 = vunpack.c.h.b16 %v146
    %v439 = vunpack.c.l.b16 %v147
    %v440 = vunpack.c.h.b16 %v147
    %v441 = vunpack.c.l.b16 %v148
    %v442 = vunpack.c.h.b16 %v148
    %v443 = vunpack.c.l.b16 %v149
    %v444 = vunpack.c.h.b16 %v149
    %v445 = vunpack.c.l.b16 %v150
    %v446 = vunpack.c.h.b16 %v150
    %v447 = vunpack.c.l.b16 %v151
    %v448 = vunpack.c.h.b16 %v151
    %v449 = vunpack.c.l.b16 %v152
    %v450 = vunpack.c.h.b16 %v152
    %v451 = vunpack.c.l.b16 %v153
    %v452 = vunpack.c.h.b16 %v153
    %v453 = vunpack.c.l.b16 %v154
    %v454 = vunpack.c.h.b16 %v154
    %v455 = vunpack.c.l.b16 %v155
    %v456 = vunpack.c.h.b16 %v155
    %v457 = vunpack.c.l.b16 %v156
    %v458 = vunpack.c.h.b16 %v156
    %v459 = vunpack.c.l.b16 %v157
    %v460 = vunpack.c.h.b16 %v157
    %v461 = vunpack.c.l.b16 %v158
    %v462 = vunpack.c.h.b16 %v158
    %v463 = vunpack.c.l.b16 %v159
    %v464 = vunpack.c.h.b16 %v159
    %v465 = vunpack.c.l.b16 %v160
    %v466 = vunpack.c.h.b16 %v160
    %v467 = vunpack.c.l.b16 %v161
    %v468 = vunpack.c.h.b16 %v161
    %v469 = vunpack.c.l.b16 %v162
    %v470 = vunpack.c.h.b16 %v162
    %v471 = vunpack.c.l.b16 %v163
    %v472 = vunpack.c.h.b16 %v163
    %v473 = vunpack.c.l.b16 %v164
    %v474 = vunpack.c.h.b16 %v164
    %v475 = vunpack.c.l.b16 %v165
    %v476 = vunpack.c.h.b16 %v165
    %v477 = vunpack.c.l.b16 %v166
    %v478 = vunpack.c.h.b16 %v166
    %v479 = vunpack.c.l.b16 %v167
    %v480 = vunpack.c.h.b16 %v167
    %v481 = vunpack.c.l.b16 %v168
    %v482 = vunpack.c.h.b16 %v168
    %v483 = vunpack.c.l.b16 %v169
    %v484 = vunpack.c.h.b16 %v169
    %v485 = vunpack.c.l.b16 %v170
    %v486 = vunpack.c.h.b16 %v170
    %v487 = vunpack.c.l.b16 %v171
    %v488 = vunpack.c.h.b16 %v171
    %v489 = vunpack.c.l.b16 %v172
    %v490 = vunpack.c.h.b16 %v172
    %v491 = vunpack.c.l.b16 %v173
    %v492 = vunpack.c.h.b16 %v173
    %v493 = vunpack.c.l.b16 %v174
    %v494 = vunpack.c.h.b16 %v174
    %v495 = vunpack.c.l.b16 %v175
    %v496 = vunpack.c.h.b16 %v175
    %v497 = vunpack.c.l.b16 %v176
    %v498 = vunpack.c.h.b16 %v176
    %v499 = vunpack.c.l.b16 %v177
    %v500 = vunpack.c.h.b16 %v177
    %v501 = vunpack.c.l.b16 %v178
    %v502 = vunpack.c.h.b16 %v178
    %v503 = vunpack.c.l.b16 %v179
    %v504 = vunpack.c.h.b16 %v179
    %v505 = vunpack.c.l.b16 %v180
    %v506 = vunpack.c.h.b16 %v180
    %v507 = vunpack.c.l.b16 %v181
    %v508 = vunpack.c.h.b16 %v181
    %v509 = vunpack.c.l.b16 %v182
    %v510 = vunpack.c.h.b16 %v182
    %v511 = vunpack.c.l.b16 %v183
    %v512 = vunpack.c.h.b16 %v183
    %v513 = vunpack.c.l.b16 %v184
    %v514 = vunpack.c.h.b16 %v184
    %v515 = vunpack.c.l.b16 %v185
    %v516 = vunpack.c.h.b16 %v185
    %v517 = vunpack.c.l.b16 %v186
    %v518 = vunpack.c.h.b16 %v186
    %v519 = vunpack.c.l.b16 %v187
    %v520 = vunpack.c.h.b16 %v187
    %v521 = vunpack.c.l.b16 %v188
    %v522 = vunpack.c.h.b16 %v188
    %v523 = vunpack.c.l.b16 %v189
    %v524 = vunpack.c.h.b16 %v189
    %v525 = vunpack.c.l.b16 %v190
    %v526 = vunpack.c.h.b16 %v190
    %v527 = vunpack.c.l.b16 %v191
    %v528 = vunpack.c.h.b16 %v191
    %v529 = vunpack.c.l.b16 %v192
    %v530 = vunpack.c.h.b16 %v192
    %v531 = vunpack.c.l.b16 %v193
    %v532 = vunpack.c.h.b16 %v193
    %v533 = vunpack.c.l.b16 %v194
    %v534 = vunpack.c.h.b16 %v194
    %v535 = vunpack.c.l.b16 %v195
    %v536 = vunpack.c.h.b16 %v195
    %v537 = vunpack.c.l.b16 %v196
    %v538 = vunpack.c.h.b16 %v196
    %v539 = vunpack.c.l.b16 %v197
    %v540 = vunpack.c.h.b16 %v197
    %v541 = vunpack.c.l.b16 %v198
    %v542 = vunpack.c.h.b16 %v198
    %v543 = vunpack.c.l.b16 %v199
    %v544 = vunpack.c.h.b16 %v199
    %v545 = vunpack.c.l.b16 %v200
    %v546 = vunpack.c.h.b16 %v200
    %v547 = vunpack.c.l.b16 %v201
    %v548 = vunpack.c.h.b16 %v201
    %v549 = vunpack.c.l.b16 %v202
    %v550 = vunpack.c.h.b16 %v202
    %v551 = vunpack.c.l.b16 %v203
    %v552 = vunpack.c.h.b16 %v203
    %v553 = vunpack.c.l.b16 %v204
    %v554 = vunpack.c.h.b16 %v204
    %v555 = vunpack.c.l.b16 %v205
    %v556 = vunpack.c.h.b16 %v205
    %v557 = vunpack.c.l.b16 %v206
    %v558 = vunpack.c.h.b16 %v206
    %v559 = vunpack.c.l.b16 %v207
    %v560 = vunpack.c.h.b16 %v207
    %v561 = vunpack.c.l.b16 %v208
    %v562 = vunpack.c.h.b16 %v208
    %v563 = vunpack.c.l.b16 %v209
    %v564 = vunpack.c.h.b16 %v209
    %v565 = vunpack.c.l.b16 %v210
    %v566 = vunpack.c.h.b16 %v210
    %v567 = vunpack.c.l.b16 %v211
    %v568 = vunpack.c.h.b16 %v211
    %v569 = vunpack.c.l.b16 %v212
    %v570 = vunpack.c.h.b16 %v212
    %v571 = vunpack.c.l.b16 %v213
    %v572 = vunpack.c.h.b16 %v213
    %v573 = vunpack.c.l.b16 %v214
    %v574 = vunpack.c.h.b16 %v214
    %v575 = vunpack.c.l.b16 %v215
    %v576 = vunpack.c.h.b16 %v215
    %v577 = vunpack.c.l.b16 %v216
    %v578 = vunpack.c.h.b16 %v216
    %v579 = vunpack.c.l.b16 %v217
    %v580 = vunpack.c.h.b16 %v217
    %v581 = vunpack.c.l.b16 %v218
    %v582 = vunpack.c.h.b16 %v218
    %v583 = vunpack.c.l.b16 %v219
    %v584 = vunpack.c.h.b16 %v219
    %v585 = vunpack.c.l.b16 %v220
    %v586 = vunpack.c.h.b16 %v220
    %v587 = vunpack.c.l.b16 %v221
    %v588 = vunpack.c.h.b16 %v221
    %v589 = vunpack.c.l.b16 %v222
    %v590 = vunpack.c.h.b16 %v222
    %v591 = vunpack.c.l.b16 %v223
    %v592 = vunpack.c.h.b16 %v223
    %v593 = vunpack.c.l.b16 %v224
    %v594 = vunpack.c.h.b16 %v224
    %v595 = vunpack.c.l.b16 %v225
    %v596 = vunpack.c.h.b16 %v225
    %v597 = vunpack.c.l.b16 %v226
    %v598 = vunpack.c.h.b16 %v226
    %v599 = vunpack.c.l.b16 %v227
    %v600 = vunpack.c.h.b16 %v227
    %v601 = vunpack.c.l.b16 %v228
    %v602 = vunpack.c.h.b16 %v228
    %v603 = vunpack.c.l.b16 %v229
    %v604 = vunpack.c.h.b16 %v229
    %v605 = vunpack.c.l.b16 %v230
    %v606 = vunpack.c.h.b16 %v230
    %v607 = vunpack.c.l.b16 %v231
    %v608 = vunpack.c.h.b16 %v231
    %v609 = vunpack.c.l.b16 %v232
    %v610 = vunpack.c.h.b16 %v232
    %v611 = vunpack.c.l.b16 %v233
    %v612 = vunpack.c.h.b16 %v233
    %v613 = vunpack.c.l.b16 %v234
    %v614 = vunpack.c.h.b16 %v234
    %v615 = vunpack.c.l.b16 %v235
    %v616 = vunpack.c.h.b16 %v235
    %v617 = vunpack.c.l.b16 %v236
    %v618 = vunpack.c.h.b16 %v236
    %v619 = vunpack.c.l.b16 %v237
    %v620 = vunpack.c.h.b16 %v237
    %v621 = vunpack.c.l.b16 %v238
    %v622 = vunpack.c.h.b16 %v238
    %v623 = vunpack.c.l.b16 %v239
    %v624 = vunpack.c.h.b16 %v239
    %v625 = vunpack.c.l.b16 %v240
    %v626 = vunpack.c.h.b16 %v240
    %v627 = vunpack.c.l.b16 %v241
    %v628 = vunpack.c.h.b16 %v241
    %v629 = vunpack.c.l.b16 %v242
    %v630 = vunpack.c.h.b16 %v242
    %v631 = vunpack.c.l.b16 %v243
    %v632 = vunpack.c.h.b16 %v243
    %v633 = vunpack.c.l.b16 %v244
    %v634 = vunpack.c.h.b16 %v244
    %v635 = vpack.c.b16 %v381, %v379
    %v636 = vpack.c.b16 %v382, %v380
    %v637 = vpack.c.b16 %v385, %v383
    %v638 = vpack.c.b16 %v386, %v384
    %v639 = vpack.c.b16 %v389, %v387
    %v640 = vpack.c.b16 %v390, %v388
    %v641 = vpack.c.b16 %v393, %v391
    %v642 = vpack.c.b16 %v394, %v392
    %v643 = vpack.c.b16 %v397, %v395
    %v644 = vpack.c.b16 %v398, %v396
    %v645 = vpack.c.b16 %v401, %v399
    %v646 = vpack.c.b16 %v402, %v400
    %v647 = vpack.c.b16 %v405, %v403
    %v648 = vpack.c.b16 %v406, %v404
    %v649 = vpack.c.b16 %v409, %v407
    %v650 = vpack.c.b16 %v410, %v408
    %v651 = vpack.c.b16 %v413, %v411
    %v652 = vpack.c.b16 %v414, %v412
    %v653 = vpack.c.b16 %v417, %v415
    %v654 = vpack.c.b16 %v418, %v416
    %v655 = vpack.c.b16 %v421, %v419
    %v656 = vpack.c.b16 %v422, %v420
    %v657 = vpack.c.b16 %v425, %v423
    %v658 = vpack.c.b16 %v426, %v424
    %v659 = vpack.c.b16 %v429, %v427
    %v660 = vpack.c.b16 %v430, %v428
    %v661 = vpack.c.b16 %v433, %v431
    %v662 = vpack.c.b16 %v434, %v432
    %v663 = vpack.c.b16 %v437, %v435
    %v664 = vpack.c.b16 %v438, %v436
    %v665 = vpack.c.b16 %v441, %v439
    %v666 = vpack.c.b16 %v442, %v440
    %v667 = vpack.c.b16 %v445, %v443
    %v668 = vpack.c.b16 %v446, %v444
    %v669 = vpack.c.b16 %v449, %v447
    %v670 = vpack.c.b16 %v450, %v448
    %v671 = vpack.c.b16 %v453, %v451
    %v672 = vpack.c.b16 %v454, %v452
    %v673 = vpack.c.b16 %v457, %v455
    %v674 = vpack.c.b16 %v458, %v456
    %v675 = vpack.c.b16 %v461, %v459
    %v676 = vpack.c.b16 %v462, %v460
    %v677 = vpack.c.b16 %v465, %v463
    %v678 = vpack.c.b16 %v466, %v464
    %v679 = vpack.c.b16 %v469, %v467
    %v680 = vpack.c.b16 %v470, %v468
    %v681 = vpack.c.b16 %v473, %v471
    %v682 = vpack.c.b16 %v474, %v472
    %v683 = vpack.c.b16 %v477, %v475
    %v684 = vpack.c.b16 %v478, %v476
    %v685 = vpack.c.b16 %v481, %v479
    %v686 = vpack.c.b16 %v482, %v480
    %v687 = vpack.c.b16 %v485, %v483
    %v688 = vpack.c.b16 %v486, %v484
    %v689 = vpack.c.b16 %v489, %v487
    %v690 = vpack.c.b16 %v490, %v488
    %v691 = vpack.c.b16 %v493, %v491
    %v692 = vpack.c.b16 %v494, %v492
    %v693 = vpack.c.b16 %v497, %v495
    %v694 = vpack.c.b16 %v498, %v496
    %v695 = vpack.c.b16 %v501, %v499
    %v696 = vpack.c.b16 %v502, %v500
    %v697 = vpack.c.b16 %v505, %v503
    %v698 = vpack.c.b16 %v506, %v504
    %v699 = vpack.c.b16 %v509, %v507
    %v700 = vpack.c.b16 %v510, %v508
    %v701 = vpack.c.b16 %v513, %v511
    %v702 = vpack.c.b16 %v514, %v512
    %v703 = vpack.c.b16 %v517, %v515
    %v704 = vpack.c.b16 %v518, %v516
    %v705 = vpack.c.b16 %v521, %v519
    %v706 = vpack.c.b16 %v522, %v520
    %v707 = vpack.c.b16 %v525, %v523
    %v708 = vpack.c.b16 %v526, %v524
    %v709 = vpack.c.b16 %v529, %v527
    %v710 = vpack.c.b16 %v530, %v528
    %v711 = vpack.c.b16 %v533, %v531
    %v712 = vpack.c.b16 %v534, %v532
    %v713 = vpack.c.b16 %v537, %v535
    %v714 = vpack.c.b16 %v538, %v536
    %v715 = vpack.c.b16 %v541, %v539
    %v716 = vpack.c.b16 %v542, %v540
    %v717 = vpack.c.b16 %v545, %v543
    %v718 = vpack.c.b16 %v546, %v544
    %v719 = vpack.c.b16 %v549, %v547
    %v720 = vpack.c.b16 %v550, %v548
    %v721 = vpack.c.b16 %v553, %v551
    %v722 = vpack.c.b16 %v554, %v552
    %v723 = vpack.c.b16 %v557, %v555
    %v724 = vpack.c.b16 %v558, %v556
    %v725 = vpack.c.b16 %v561, %v559
    %v726 = vpack.c.b16 %v562, %v560
    %v727 = vpack.c.b16 %v565, %v563
    %v728 = vpack.c.b16 %v566, %v564
    %v729 = vpack.c.b16 %v569, %v567
    %v730 = vpack.c.b16 %v570, %v568
    %v731 = vpack.c.b16 %v573, %v571
    %v732 = vpack.c.b16 %v574, %v572
    %v733 = vpack.c.b16 %v577, %v575
    %v734 = vpack.c.b16 %v578, %v576
    %v735 = vpack.c.b16 %v581, %v579
    %v736 = vpack.c.b16 %v582, %v580
    %v737 = vpack.c.b16 %v585, %v583
    %v738 = vpack.c.b16 %v586, %v584
    %v739 = vpack.c.b16 %v589, %v587
    %v740 = vpack.c.b16 %v590, %v588
    %v741 = vpack.c.b16 %v593, %v591
    %v742 = vpack.c.b16 %v594, %v592
    %v743 = vpack.c.b16 %v597, %v595
    %v744 = vpack.c.b16 %v598, %v596
    %v745 = vpack.c.b16 %v601, %v599
    %v746 = vpack.c.b16 %v602, %v600
    %v747 = vpack.c.b16 %v605, %v603
    %v748 = vpack.c.b16 %v606, %v604
    %v749 = vpack.c.b16 %v609, %v607
    %v750 = vpack.c.b16 %v610, %v608
    %v751 = vpack.c.b16 %v613, %v611
    %v752 = vpack.c.b16 %v614, %v612
    %v753 = vpack.c.b16 %v617, %v615
    %v754 = vpack.c.b16 %v618, %v616
    %v755 = vpack.c.b16 %v621, %v619
    %v756 = vpack.c.b16 %v622, %v620
    %v757 = vpack.c.b16 %v625, %v623
    %v758 = vpack.c.b16 %v626, %v624
    %v759 = vpack.c.b16 %v629, %v627
    %v760 = vpack.c.b16 %v630, %v628
    %v761 = vpack.c.b16 %v633, %v631
    %v762 = vpack.c.b16 %v634, %v632
    %891 = vmatpush.bf16.msra.mxu0 %v649
    %892 = vmatpush.bf16.msra.mxu0 %v647
    %893 = vmatpush.bf16.msra.mxu0 %v645
    %894 = vmatpush.bf16.msra.mxu0 %v643
    %895 = vmatpush.bf16.msra.mxu0 %v641
    %896 = vmatpush.bf16.msra.mxu0 %v639
    %897 = vmatpush.bf16.msra.mxu0 %v637
    %898 = vmatpush.bf16.msra.mxu0 %v635
    %899 = vmatmul.bf16.gmra.mxu0 %v109
    %v900 = vpop.f32.mrf.mxu0
    %v901 = vadd.f32 %v247, %v900
    %v902 = vpop.f32.mrf.mxu0
    %903 = vdwg.mxu0
    %904 = vmatpush.bf16.msra.mxu0 %v665
    %905 = vmatpush.bf16.msra.mxu0 %v663
    %906 = vmatpush.bf16.msra.mxu0 %v661
    %907 = vmatpush.bf16.msra.mxu0 %v659
    %908 = vmatpush.bf16.msra.mxu0 %v657
    %909 = vmatpush.bf16.msra.mxu0 %v655
    %910 = vmatpush.bf16.msra.mxu0 %v653
    %911 = vmatpush.bf16.msra.mxu0 %v651
    %912 = vmatmul.bf16.gmra.mxu0 %v110
    %v913 = vpop.f32.mrf.mxu0
    %v914 = vadd.f32 %v901, %v913
    %v915 = vpop.f32.mrf.mxu0
    %916 = vdwg.mxu0
    %917 = vmatpush.bf16.msra.mxu0 %v681
    %918 = vmatpush.bf16.msra.mxu0 %v679
    %919 = vmatpush.bf16.msra.mxu0 %v677
    %920 = vmatpush.bf16.msra.mxu0 %v675
    %921 = vmatpush.bf16.msra.mxu0 %v673
    %922 = vmatpush.bf16.msra.mxu0 %v671
    %923 = vmatpush.bf16.msra.mxu0 %v669
    %924 = vmatpush.bf16.msra.mxu0 %v667
    %925 = vmatmul.bf16.gmra.mxu0 %v111
    %v926 = vpop.f32.mrf.mxu0
    %v927 = vadd.f32 %v914, %v926
    %v928 = vpop.f32.mrf.mxu0
    %929 = vdwg.mxu0
    %930 = vmatpush.bf16.msra.mxu0 %v697
    %931 = vmatpush.bf16.msra.mxu0 %v695
    %932 = vmatpush.bf16.msra.mxu0 %v693
    %933 = vmatpush.bf16.msra.mxu0 %v691
    %934 = vmatpush.bf16.msra.mxu0 %v689
    %935 = vmatpush.bf16.msra.mxu0 %v687
    %936 = vmatpush.bf16.msra.mxu0 %v685
    %937 = vmatpush.bf16.msra.mxu0 %v683
    %938 = vmatmul.bf16.gmra.mxu0 %v112
    %v939 = vpop.f32.mrf.mxu0
    %v940 = vadd.f32 %v927, %v939
    %v941 = vpop.f32.mrf.mxu0
    %942 = vdwg.mxu0
    %943 = vmatpush.bf16.msra.mxu0 %v713
    %944 = vmatpush.bf16.msra.mxu0 %v711
    %945 = vmatpush.bf16.msra.mxu0 %v709
    %946 = vmatpush.bf16.msra.mxu0 %v707
    %947 = vmatpush.bf16.msra.mxu0 %v705
    %948 = vmatpush.bf16.msra.mxu0 %v703
    %949 = vmatpush.bf16.msra.mxu0 %v701
    %950 = vmatpush.bf16.msra.mxu0 %v699
    %951 = vmatmul.bf16.gmra.mxu0 %v113
    %v952 = vpop.f32.mrf.mxu0
    %v953 = vadd.f32 %v940, %v952
    %v954 = vpop.f32.mrf.mxu0
    %955 = vdwg.mxu0
    %956 = vmatpush.bf16.msra.mxu0 %v729
    %957 = vmatpush.bf16.msra.mxu0 %v727
    %958 = vmatpush.bf16.msra.mxu0 %v725
    %959 = vmatpush.bf16.msra.mxu0 %v723
    %960 = vmatpush.bf16.msra.mxu0 %v721
    %961 = vmatpush.bf16.msra.mxu0 %v719
    %962 = vmatpush.bf16.msra.mxu0 %v717
    %963 = vmatpush.bf16.msra.mxu0 %v715
    %964 = vmatmul.bf16.gmra.mxu0 %v114
    %v965 = vpop.f32.mrf.mxu0
    %v966 = vadd.f32 %v953, %v965
    %v967 = vpop.f32.mrf.mxu0
    %968 = vdwg.mxu0
    %969 = vmatpush.bf16.msra.mxu0 %v745
    %970 = vmatpush.bf16.msra.mxu0 %v743
    %971 = vmatpush.bf16.msra.mxu0 %v741
    %972 = vmatpush.bf16.msra.mxu0 %v739
    %973 = vmatpush.bf16.msra.mxu0 %v737
    %974 = vmatpush.bf16.msra.mxu0 %v735
    %975 = vmatpush.bf16.msra.mxu0 %v733
    %976 = vmatpush.bf16.msra.mxu0 %v731
    %977 = vmatmul.bf16.gmra.mxu0 %v115
    %v978 = vpop.f32.mrf.mxu0
    %v979 = vadd.f32 %v966, %v978
    %v980 = vpop.f32.mrf.mxu0
    %981 = vdwg.mxu0
    %982 = vmatpush.bf16.msra.mxu0 %v761
    %983 = vmatpush.bf16.msra.mxu0 %v759
    %984 = vmatpush.bf16.msra.mxu0 %v757
    %985 = vmatpush.bf16.msra.mxu0 %v755
    %986 = vmatpush.bf16.msra.mxu0 %v753
    %987 = vmatpush.bf16.msra.mxu0 %v751
    %988 = vmatpush.bf16.msra.mxu0 %v749
    %989 = vmatpush.bf16.msra.mxu0 %v747
    %990 = vmatmul.bf16.gmra.mxu0 %v116
    %v991 = vpop.f32.mrf.mxu0
    %v992 = vadd.f32 %v979, %v991
    %v993 = vpop.f32.mrf.mxu0
    %994 = vdwg.mxu0
    %995 = vmatpush.bf16.msra.mxu0 %v650
    %996 = vmatpush.bf16.msra.mxu0 %v648
    %997 = vmatpush.bf16.msra.mxu0 %v646
    %998 = vmatpush.bf16.msra.mxu0 %v644
    %999 = vmatpush.bf16.msra.mxu0 %v642
    %1000 = vmatpush.bf16.msra.mxu0 %v640
    %1001 = vmatpush.bf16.msra.mxu0 %v638
    %1002 = vmatpush.bf16.msra.mxu0 %v636
    %1003 = vmatmul.bf16.gmra.mxu0 %v109
    %v1004 = vpop.f32.mrf.mxu0
    %v1005 = vadd.f32 %v248, %v1004
    %v1006 = vpop.f32.mrf.mxu0
    %1007 = vdwg.mxu0
    %1008 = vmatpush.bf16.msra.mxu0 %v666
    %1009 = vmatpush.bf16.msra.mxu0 %v664
    %1010 = vmatpush.bf16.msra.mxu0 %v662
    %1011 = vmatpush.bf16.msra.mxu0 %v660
    %1012 = vmatpush.bf16.msra.mxu0 %v658
    %1013 = vmatpush.bf16.msra.mxu0 %v656
    %1014 = vmatpush.bf16.msra.mxu0 %v654
    %1015 = vmatpush.bf16.msra.mxu0 %v652
    %1016 = vmatmul.bf16.gmra.mxu0 %v110
    %v1017 = vpop.f32.mrf.mxu0
    %v1018 = vadd.f32 %v1005, %v1017
    %v1019 = vpop.f32.mrf.mxu0
    %1020 = vdwg.mxu0
    %1021 = vmatpush.bf16.msra.mxu0 %v682
    %1022 = vmatpush.bf16.msra.mxu0 %v680
    %1023 = vmatpush.bf16.msra.mxu0 %v678
    %1024 = vmatpush.bf16.msra.mxu0 %v676
    %1025 = vmatpush.bf16.msra.mxu0 %v674
    %1026 = vmatpush.bf16.msra.mxu0 %v672
    %1027 = vmatpush.bf16.msra.mxu0 %v670
    %1028 = vmatpush.bf16.msra.mxu0 %v668
    %1029 = vmatmul.bf16.gmra.mxu0 %v111
    %v1030 = vpop.f32.mrf.mxu0
    %v1031 = vadd.f32 %v1018, %v1030
    %v1032 = vpop.f32.mrf.mxu0
    %1033 = vdwg.mxu0
    %1034 = vmatpush.bf16.msra.mxu0 %v698
    %1035 = vmatpush.bf16.msra.mxu0 %v696
    %1036 = vmatpush.bf16.msra.mxu0 %v694
    %1037 = vmatpush.bf16.msra.mxu0 %v692
    %1038 = vmatpush.bf16.msra.mxu0 %v690
    %1039 = vmatpush.bf16.msra.mxu0 %v688
    %1040 = vmatpush.bf16.msra.mxu0 %v686
    %1041 = vmatpush.bf16.msra.mxu0 %v684
    %1042 = vmatmul.bf16.gmra.mxu0 %v112
    %v1043 = vpop.f32.mrf.mxu0
    %v1044 = vadd.f32 %v1031, %v1043
    %v1045 = vpop.f32.mrf.mxu0
    %1046 = vdwg.mxu0
    %1047 = vmatpush.bf16.msra.mxu0 %v714
    %1048 = vmatpush.bf16.msra.mxu0 %v712
    %1049 = vmatpush.bf16.msra.mxu0 %v710
    %1050 = vmatpush.bf16.msra.mxu0 %v708
    %1051 = vmatpush.bf16.msra.mxu0 %v706
    %1052 = vmatpush.bf16.msra.mxu0 %v704
    %1053 = vmatpush.bf16.msra.mxu0 %v702
    %1054 = vmatpush.bf16.msra.mxu0 %v700
    %1055 = vmatmul.bf16.gmra.mxu0 %v113
    %v1056 = vpop.f32.mrf.mxu0
    %v1057 = vadd.f32 %v1044, %v1056
    %v1058 = vpop.f32.mrf.mxu0
    %1059 = vdwg.mxu0
    %1060 = vmatpush.bf16.msra.mxu0 %v730
    %1061 = vmatpush.bf16.msra.mxu0 %v728
    %1062 = vmatpush.bf16.msra.mxu0 %v726
    %1063 = vmatpush.bf16.msra.mxu0 %v724
    %1064 = vmatpush.bf16.msra.mxu0 %v722
    %1065 = vmatpush.bf16.msra.mxu0 %v720
    %1066 = vmatpush.bf16.msra.mxu0 %v718
    %1067 = vmatpush.bf16.msra.mxu0 %v716
    %1068 = vmatmul.bf16.gmra.mxu0 %v114
    %v1069 = vpop.f32.mrf.mxu0
    %v1070 = vadd.f32 %v1057, %v1069
    %v1071 = vpop.f32.mrf.mxu0
    %1072 = vdwg.mxu0
    %1073 = vmatpush.bf16.msra.mxu0 %v746
    %1074 = vmatpush.bf16.msra.mxu0 %v744
    %1075 = vmatpush.bf16.msra.mxu0 %v742
    %1076 = vmatpush.bf16.msra.mxu0 %v740
    %1077 = vmatpush.bf16.msra.mxu0 %v738
    %1078 = vmatpush.bf16.msra.mxu0 %v736
    %1079 = vmatpush.bf16.msra.mxu0 %v734
    %1080 = vmatpush.bf16.msra.mxu0 %v732
    %1081 = vmatmul.bf16.gmra.mxu0 %v115
    %v1082 = vpop.f32.mrf.mxu0
    %v1083 = vadd.f32 %v1070, %v1082
    %v1084 = vpop.f32.mrf.mxu0
    %1085 = vdwg.mxu0
    %1086 = vmatpush.bf16.msra.mxu0 %v762
    %1087 = vmatpush.bf16.msra.mxu0 %v760
    %1088 = vmatpush.bf16.msra.mxu0 %v758
    %1089 = vmatpush.bf16.msra.mxu0 %v756
    %1090 = vmatpush.bf16.msra.mxu0 %v754
    %1091 = vmatpush.bf16.msra.mxu0 %v752
    %1092 = vmatpush.bf16.msra.mxu0 %v750
    %1093 = vmatpush.bf16.msra.mxu0 %v748
    %1094 = vmatmul.bf16.gmra.mxu0 %v116
    %v1095 = vpop.f32.mrf.mxu0
    %v1096 = vadd.f32 %v1083, %v1095
    %v1097 = vpop.f32.mrf.mxu0
    %1098 = vdwg.mxu0
    %v1099 = vmax.f32 %v992, 0.0
    %v1100 = vmax.f32 %v1096, 0.0
    %v1101 = vld [vmem:[#allocation5] sm:$0xff]
    %v1102 = vld [vmem:[#allocation5 + $0x8] sm:$0xff]
    %v1103 = vld [vmem:[#allocation5 + $0x10] sm:$0xff]
    %v1104 = vld [vmem:[#allocation5 + $0x18] sm:$0xff]
    %v1105 = vld [vmem:[#allocation5 + $0x20] sm:$0xff]
    %v1106 = vld [vmem:[#allocation5 + $0x28] sm:$0xff]
    %v1107 = vld [vmem:[#allocation5 + $0x30] sm:$0xff]
    %v1108 = vld [vmem:[#allocation5 + $0x38] sm:$0xff]
    %v1109 = vld [vmem:[#allocation5 + $0x40] sm:$0xff]
    %v1110 = vld [vmem:[#allocation5 + $0x48] sm:$0xff]
    %v1111 = vld [vmem:[#allocation5 + $0x50] sm:$0xff]
    %v1112 = vld [vmem:[#allocation5 + $0x58] sm:$0xff]
    %v1113 = vld [vmem:[#allocation5 + $0x60] sm:$0xff]
    %v1114 = vld [vmem:[#allocation5 + $0x68] sm:$0xff]
    %v1115 = vld [vmem:[#allocation5 + $0x70] sm:$0xff]
    %v1116 = vld [vmem:[#allocation5 + $0x78] sm:$0xff]
    %v1117 = vld [vmem:[#allocation5 + $0x80] sm:$0xff]
    %v1118 = vld [vmem:[#allocation5 + $0x88] sm:$0xff]
    %v1119 = vld [vmem:[#allocation5 + $0x90] sm:$0xff]
    %v1120 = vld [vmem:[#allocation5 + $0x98] sm:$0xff]
    %v1121 = vld [vmem:[#allocation5 + $0xa0] sm:$0xff]
    %v1122 = vld [vmem:[#allocation5 + $0xa8] sm:$0xff]
    %v1123 = vld [vmem:[#allocation5 + $0xb0] sm:$0xff]
    %v1124 = vld [vmem:[#allocation5 + $0xb8] sm:$0xff]
    %v1125 = vld [vmem:[#allocation5 + $0xc0] sm:$0xff]
    %v1126 = vld [vmem:[#allocation5 + $0xc8] sm:$0xff]
    %v1127 = vld [vmem:[#allocation5 + $0xd0] sm:$0xff]
    %v1128 = vld [vmem:[#allocation5 + $0xd8] sm:$0xff]
    %v1129 = vld [vmem:[#allocation5 + $0xe0] sm:$0xff]
    %v1130 = vld [vmem:[#allocation5 + $0xe8] sm:$0xff]
    %v1131 = vld [vmem:[#allocation5 + $0xf0] sm:$0xff]
    %v1132 = vld [vmem:[#allocation5 + $0xf8] sm:$0xff]
    %v1133 = vld [vmem:[%s4] sm:$0x1]
    %v1135 = vperm.slane %v1133, 0
    %1137 = vmatpush.msra.mxu0 %v1116
    %1138 = vmatpush.msra.mxu0 %v1115
    %1139 = vmatpush.msra.mxu0 %v1114
    %1140 = vmatpush.msra.mxu0 %v1113
    %1141 = vmatpush.msra.mxu0 %v1112
    %1142 = vmatpush.msra.mxu0 %v1111
    %1143 = vmatpush.msra.mxu0 %v1110
    %1144 = vmatpush.msra.mxu0 %v1109
    %1145 = vmatpush.msra.mxu0 %v1108
    %1146 = vmatpush.msra.mxu0 %v1107
    %1147 = vmatpush.msra.mxu0 %v1106
    %1148 = vmatpush.msra.mxu0 %v1105
    %1149 = vmatpush.msra.mxu0 %v1104
    %1150 = vmatpush.msra.mxu0 %v1103
    %1151 = vmatpush.msra.mxu0 %v1102
    %1152 = vmatpush.msra.mxu0 %v1101
    %1153 = vmatmul.f32.gmra.mxu0 %v1099
    %v1154 = vpop.f32.mrf.mxu0
    %v1155 = vadd.f32 %v1135, %v1154
    %1156 = vdwg.mxu0
    %1157 = vmatpush.msra.mxu0 %v1132
    %1158 = vmatpush.msra.mxu0 %v1131
    %1159 = vmatpush.msra.mxu0 %v1130
    %1160 = vmatpush.msra.mxu0 %v1129
    %1161 = vmatpush.msra.mxu0 %v1128
    %1162 = vmatpush.msra.mxu0 %v1127
    %1163 = vmatpush.msra.mxu0 %v1126
    %1164 = vmatpush.msra.mxu0 %v1125
    %1165 = vmatpush.msra.mxu0 %v1124
    %1166 = vmatpush.msra.mxu0 %v1123
    %1167 = vmatpush.msra.mxu0 %v1122
    %1168 = vmatpush.msra.mxu0 %v1121
    %1169 = vmatpush.msra.mxu0 %v1120
    %1170 = vmatpush.msra.mxu0 %v1119
    %1171 = vmatpush.msra.mxu0 %v1118
    %1172 = vmatpush.msra.mxu0 %v1117
    %1173 = vmatmul.f32.gmra.mxu0 %v1100
    %v1174 = vpop.f32.mrf.mxu0
    %v1175 = vadd.f32 %v1155, %v1174
    %1176 = vdwg.mxu0
    %v1177 = vmax.f32 %v1175, 0.0
    %1179 = vrot.lane.b32.xlu0 %v1177, 96
    %v1180 = vpop.permute.xlu0 %1179
    %v1182 = vadd.f32 %v1177, %v1180
    %1183 = vrot.lane.b32.xlu0 %v1177, 64
    %v1184 = vpop.permute.xlu0 %1183
    %v1186 = vadd.f32 %v1182, %v1184
    %1187 = vrot.lane.b32.xlu0 %v1177, 32
    %v1188 = vpop.permute.xlu0 %1187
    %v1190 = vadd.f32 %v1186, %v1188
    %v1191 = vmul.f32 %v1190, 0.25
    %v1192 = vadd.f32 %v1191, 1.0
    %v1193 = vrsqrt.pop %v1192
    %v1194 = vmul.f32 %v1193, %v1192
    %v1195 = vmul.f32 %v1194, %v1193
    %v1196 = vmul.f32 0.5, %v1195
    %v1197 = vsub.f32 1.5, %v1196
    %v1198 = vmul.f32 %v1193, %v1197
    %v1199 = vmul.f32 %v1192, %v1198
    %vm1200 = vcmp.eq.f32.partialorder %v1192, inf
    %v1201 = vsel %vm1200, %v1192, %v1199
    %vm1202 = vcmp.eq.f32.partialorder %v1192, 0.0
    %v1203 = vand.u32 %v1192, 2147483648
    %v1204 = vsel %vm1202, %v1203, %v1201
    %v1205 = vlog2.pop %v1192
    %v1206 = vmul.f32 %v1205, 0.6931472
    %1208 = vrot.lane.b32.xlu0 %v1204, 32
    %v1209 = vpop.permute.xlu0 %1208
    %1212 = vrot.lane.b32.xlu0 %v1206, 64
    %v1213 = vpop.permute.xlu0 %1212
    %vm1215 = vcmask 261120
    %v1216 = vsel %vm1215, %v1191, %v1209
    %vm1217 = vcmask 523264
    %v1218 = vsel %vm1217, %v1216, %v1213
    %v1219 = vld [vmem:[#allocation7] sm:$0xff]
    %v1220 = vld [vmem:[#allocation7 + $0x8] sm:$0xff]
    %v1221 = vld [vmem:[#allocation7 + $0x10] sm:$0xff]
    %v1222 = vld [vmem:[#allocation7 + $0x18] sm:$0xff]
    %v1223 = vld [vmem:[#allocation7 + $0x20] sm:$0xff]
    %v1224 = vld [vmem:[#allocation7 + $0x28] sm:$0xff]
    %v1225 = vld [vmem:[#allocation7 + $0x30] sm:$0xff]
    %v1226 = vld [vmem:[#allocation7 + $0x38] sm:$0xff]
    %v1227 = vld [vmem:[#allocation7 + $0x40] sm:$0xff]
    %v1228 = vld [vmem:[#allocation7 + $0x48] sm:$0xff]
    %v1229 = vld [vmem:[#allocation7 + $0x50] sm:$0xff]
    %v1230 = vld [vmem:[#allocation7 + $0x58] sm:$0xff]
    %v1231 = vld [vmem:[%s6] sm:$0x1]
    %v1233 = vperm.slane %v1231, 0
    %vm1235 = vcmask 785408
    %v1237 = vsel %vm1235, %v1218, 0
    %1239 = vmatpush.msra.mxu0 0.0
    %1240 = vmatpush.msra.mxu0 0.0
    %1241 = vmatpush.msra.mxu0 0.0
    %1242 = vmatpush.msra.mxu0 0.0
    %1243 = vmatpush.msra.mxu0 %v1230
    %1244 = vmatpush.msra.mxu0 %v1229
    %1245 = vmatpush.msra.mxu0 %v1228
    %1246 = vmatpush.msra.mxu0 %v1227
    %1247 = vmatpush.msra.mxu0 %v1226
    %1248 = vmatpush.msra.mxu0 %v1225
    %1249 = vmatpush.msra.mxu0 %v1224
    %1250 = vmatpush.msra.mxu0 %v1223
    %1251 = vmatpush.msra.mxu0 %v1222
    %1252 = vmatpush.msra.mxu0 %v1221
    %1253 = vmatpush.msra.mxu0 %v1220
    %1254 = vmatpush.msra.mxu0 %v1219
    %1255 = vmatmul.f32.gmra.mxu0 %v1237
    %v1256 = vpop.f32.mrf.mxu0
    %v1257 = vadd.f32 %v1233, %v1256
    %1258 = vdwg.mxu0
    %v1259 = vmax.f32 %v1257, 0.0
    %1261 = vrot.lane.b32.xlu0 %v1259, 96
    %v1262 = vpop.permute.xlu0 %1261
    %v1264 = vmax.f32 %v1259, %v1262
    %1265 = vrot.lane.b32.xlu0 %v1259, 64
    %v1266 = vpop.permute.xlu0 %1265
    %v1268 = vmax.f32 %v1264, %v1266
    %v1269 = vld [vmem:[%s7] sm:$0xff]
    %v1270 = vld [vmem:[%s7 + $0x8] sm:$0xff]
    %v1271 = vld [vmem:[%s7 + $0x10] sm:$0xff]
    %v1272 = vld [vmem:[%s7 + $0x18] sm:$0xff]
    %v1273 = vld [vmem:[%s8] sm:$0x1]
    %v1275 = vperm.slane %v1273, 0
    %v1278 = vsel %vm1215, %v1268, 0
    %1280 = vmatpush.msra.mxu0 0.0
    %1281 = vmatpush.msra.mxu0 0.0
    %1282 = vmatpush.msra.mxu0 0.0
    %1283 = vmatpush.msra.mxu0 0.0
    %1284 = vmatpush.msra.mxu0 0.0
    %1285 = vmatpush.msra.mxu0 0.0
    %1286 = vmatpush.msra.mxu0 0.0
    %1287 = vmatpush.msra.mxu0 0.0
    %1288 = vmatpush.msra.mxu0 0.0
    %1289 = vmatpush.msra.mxu0 0.0
    %1290 = vmatpush.msra.mxu0 0.0
    %1291 = vmatpush.msra.mxu0 0.0
    %1292 = vmatpush.msra.mxu0 %v1272
    %1293 = vmatpush.msra.mxu0 %v1271
    %1294 = vmatpush.msra.mxu0 %v1270
    %1295 = vmatpush.msra.mxu0 %v1269
    %1296 = vmatmul.f32.gmra.mxu0 %v1278
    %v1297 = vpop.f32.mrf.mxu0
    %v1298 = vadd.f32 %v1275, %v1297
    %1299 = vdwg.mxu0
    %v1300 = vmax.f32 %v1298, 0.0
    %v1301 = vld [vmem:[%s9] sm:$0xff]
    %v1302 = vld [vmem:[%s9 + $0x8] sm:$0xff]
    %v1303 = vld [vmem:[%s10] sm:$0x1]
    %v1305 = vperm.slane %v1303, 0
    %vm1307 = vcmask 130048
    %v1309 = vsel %vm1307, %v1300, 0
    %1311 = vmatpush.msra.mxu0 0.0
    %1312 = vmatpush.msra.mxu0 0.0
    %1313 = vmatpush.msra.mxu0 0.0
    %1314 = vmatpush.msra.mxu0 0.0
    %1315 = vmatpush.msra.mxu0 0.0
    %1316 = vmatpush.msra.mxu0 0.0
    %1317 = vmatpush.msra.mxu0 0.0
    %1318 = vmatpush.msra.mxu0 0.0
    %1319 = vmatpush.msra.mxu0 0.0
    %1320 = vmatpush.msra.mxu0 0.0
    %1321 = vmatpush.msra.mxu0 0.0
    %1322 = vmatpush.msra.mxu0 0.0
    %1323 = vmatpush.msra.mxu0 0.0
    %1324 = vmatpush.msra.mxu0 0.0
    %1325 = vmatpush.msra.mxu0 %v1302
    %1326 = vmatpush.msra.mxu0 %v1301
    %1327 = vmatmul.f32.gmra.mxu0 %v1309
    %v1328 = vpop.f32.mrf.mxu0
    %v1329 = vadd.f32 %v1305, %v1328
    %1330 = vdwg.mxu0
    %vm1331 = vcmask 74752
    %1332 = vst.msk [vmem:[#allocation8] sm:$0x3] %vm1331, %v1329
    // Predicated region
    $region58: #{tpu_custom_call.1} parent=1 // pred_check
      _
    $region59: #{tpu_custom_call.1} parent=1 // pred_check_branch
      %1334 = sbr.rel (0) target = $region61
    $region60: #{tpu_custom_call.1} parent=1 // pred_region
      %1336 = vsyncadd [#allocation4], 0
      %s1338 = sshll.u32 [#allocation8], 4
      %s1339 = int_to_ptr.vmem [resolvable:$true] %s1338
      %s1340 = sshll.u32 %s11, 4
      %s1341 = int_to_ptr.hbm [resolvable:$true] %s1340
      %1343 = dma.vmem_to_hbm [thread:$0]  %s1339, 32, %s1341, [#allocation4]
    $region61: #{tpu_custom_call.1} parent=1 // pred_fallthru
      _
    // Predicated region
    $region62: #{tpu_custom_call.1} parent=1 // pred_check
      _
    $region63: #{tpu_custom_call.1} parent=1 // pred_check_branch
      %1345 = sbr.rel (0) target = $region65
    $region64: #{tpu_custom_call.1} parent=1 // pred_region
      %1347 = dma.done [#allocation4], 32
    $region65: #{tpu_custom_call.1} parent=1 // pred_fallthru
      _
    %1348 = vsyncpa [#allocation3], 1
    %1349 = vsyncpa [#allocation6], 1
    %1350 = vsyncpa [#allocation4], 1

</llo_original>
